<compile_context>
chip_gen: v7x
topology: tpu7x:2x2x1
jax: 0.10.0
libtpu: 0.0.40
codegen_flags: <defaults>
</compile_context>

<pallas_src>
import math
import jax
import jax.numpy as jnp
from jax.experimental import pallas as pl
from jax.experimental.pallas import tpu as pltpu


def _round_up(n, m):
    return (n + m - 1) // m * m


def _make_resblock_kernel(c_real, c_pad):
    """Fused LayerNorm -> Linear -> GELU -> Linear -> residual.

    Grid axis 0: row blocks (parallel). Grid axis 1: hidden-dim k-tiles
    (arbitrary / reduction): acc += GELU(xn @ w1[:, k]) @ w2[k, :].
    """
    inv_c = 1.0 / float(c_real)
    inv_sqrt2 = 1.0 / math.sqrt(2.0)

    def kernel(x_ref, g_ref, b_ref, w1_ref, b1_ref, w2_ref, b2_ref,
               o_ref, acc_ref, xn_ref):
        k = pl.program_id(1)
        nk = pl.num_programs(1)

        # ---- k == 0: LayerNorm over the real channel lanes, init accumulator ----
        @pl.when(k == 0)
        def _():
            x = x_ref[...].astype(jnp.float32)
            mu = jnp.sum(x, axis=-1, keepdims=True) * inv_c
            diff = x - mu
            if c_pad != c_real:
                # exclude padded lanes from the statistics / normed output
                lane = jax.lax.broadcasted_iota(jnp.int32, x.shape, 1)
                diff = jnp.where(lane < c_real, diff, 0.0)
            var = jnp.sum(diff * diff, axis=-1, keepdims=True) * inv_c
            xn = diff * jax.lax.rsqrt(var + 1e-5) * g_ref[...] + b_ref[...]
            acc_ref[...] = xn                      # residual term (f32)
            xn_ref[...] = xn.astype(jnp.bfloat16)  # cached MXU operand

        # ---- every k: h_k = GELU(xn @ w1[:, k]);  acc += h_k @ w2[k, :] ----
        h = jnp.dot(xn_ref[...], w1_ref[...],
                    preferred_element_type=jnp.float32) + b1_ref[...]
        # exact (erf) GELU, kept in f32 (v5e VPU/EUP have no bf16 path)
        h = 0.5 * h * (1.0 + jax.lax.erf(h * inv_sqrt2))
        acc_ref[...] += jnp.dot(h.astype(jnp.bfloat16), w2_ref[...],
                                preferred_element_type=jnp.float32)

        # ---- last k: add output bias, write back (lane-dense store) ----
        @pl.when(k == nk - 1)
        def _():
            o_ref[...] = (acc_ref[...] + b2_ref[...]).astype(o_ref.dtype)

    return kernel


def _choose_tiles(n_rows, c_pad, x_itemsize, budget_bytes):
    """Pick (TM, TK, est_bytes): biggest tiles that keep the per-step working
    set (with double buffering) inside the VMEM budget; prefer TK == Cp so the
    weights stay resident and are never re-streamed across row blocks."""
    TM = 256
    while TM > 8 and TM // 2 >= n_rows:           # shrink for tiny problems
        TM //= 2

    def est(tm, tk):
        return (2 * tm * c_pad * x_itemsize       # x tiles (double-buffered)
                + 2 * tm * c_pad * x_itemsize     # out tiles (double-buffered)
                + tm * c_pad * 4                  # f32 accumulator scratch
                + tm * c_pad * 2                  # bf16 normed-x scratch
                + 2 * 2 * c_pad * tk * 2          # w1/w2 tiles (bf16, 2-buffered)
                + 16 * c_pad * 4)                 # bias / affine rows

    tk_candidates = [t for t in (c_pad, 1024, 512, 256, 128)
                     if t <= c_pad and c_pad % t == 0]
    TK = 128
    for t in tk_candidates:                        # largest TK that fits first
        if est(TM, t) <= budget_bytes:
            TK = t
            break
    # grow the row tile while it still fits (bigger tiles -> closer to HBM roofline)
    while TM < 1024 and n_rows >= 2 * TM and est(2 * TM, TK) <= budget_bytes:
        TM *= 2
    return TM, TK, est(TM, TK)


def simple_res_block(x, gamma, beta, w1, b1, w2, b2):
    """SimpleResBlock forward.

    x: (B, S, C) activations.
    gamma, beta: (C,) LayerNorm affine.
    w1, w2: (C, C) Linear weights in (in, out) layout (transpose of PyTorch).
    b1, b2: (C,) Linear biases.
    """
    B, S, C = x.shape
    N = B * S

    # ---- padded / tiled geometry ----
    Cp = _round_up(C, 128)                                 # lane-dense channels
    budget = 48 * 1024 * 1024                              # safe under v7x 64 MiB/TC
    TM, TK, est = _choose_tiles(N, Cp, jnp.dtype(x.dtype).itemsize, budget)

    nrow = pl.cdiv(N, TM)
    if nrow > 1 and nrow % 2:                              # even #row-blocks -> both v7x TCs busy
        nrow += 1
    Np = nrow * TM
    nk = Cp // TK

    f32 = jnp.float32
    x2 = jnp.pad(x.reshape(N, C), ((0, Np - N), (0, Cp - C)))
    g2 = jnp.pad(gamma.astype(f32).reshape(1, C), ((0, 0), (0, Cp - C)))
    bt2 = jnp.pad(beta.astype(f32).reshape(1, C), ((0, 0), (0, Cp - C)))
    b1_2 = jnp.pad(b1.astype(f32).reshape(1, C), ((0, 0), (0, Cp - C)))
    b2_2 = jnp.pad(b2.astype(f32).reshape(1, C), ((0, 0), (0, Cp - C)))
    # bf16 weights: MXU-native operands, half the HBM traffic / VMEM footprint
    w1p = jnp.pad(w1.astype(jnp.bfloat16), ((0, Cp - C), (0, Cp - C)))
    w2p = jnp.pad(w2.astype(jnp.bfloat16), ((0, Cp - C), (0, Cp - C)))

    vmem_limit = int(min(max(est * 3 // 2, 32 * 1024 * 1024), 64 * 1024 * 1024))

    kernel = _make_resblock_kernel(C, Cp)

    out = pl.pallas_call(
        kernel,
        out_shape=jax.ShapeDtypeStruct((Np, Cp), x.dtype),
        grid_spec=pltpu.PrefetchScalarGridSpec(
            num_scalar_prefetch=0,
            grid=(nrow, nk),
            in_specs=[
                pl.BlockSpec((TM, Cp), lambda i, k: (i, 0)),   # x row block
                pl.BlockSpec((1, Cp), lambda i, k: (0, 0)),    # gamma
                pl.BlockSpec((1, Cp), lambda i, k: (0, 0)),    # beta
                pl.BlockSpec((Cp, TK), lambda i, k: (0, k)),   # w1 k-tile (resident if nk==1)
                pl.BlockSpec((1, TK), lambda i, k: (0, k)),    # b1 k-tile
                pl.BlockSpec((TK, Cp), lambda i, k: (k, 0)),   # w2 k-tile (resident if nk==1)
                pl.BlockSpec((1, Cp), lambda i, k: (0, 0)),    # b2
            ],
            out_specs=pl.BlockSpec((TM, Cp), lambda i, k: (i, 0)),
            scratch_shapes=[
                pltpu.VMEM((TM, Cp), jnp.float32),    # residual + y accumulator
                pltpu.VMEM((TM, Cp), jnp.bfloat16),   # cached normed x
            ],
        ),
        compiler_params=pltpu.CompilerParams(
            dimension_semantics=("parallel", "arbitrary"),
            vmem_limit_bytes=vmem_limit,
        ),
    )(x2, g2, bt2, w1p, b1_2, w2p, b2_2)

    return out[:N, :C].reshape(B, S, C)


def _reference(x, gamma, beta, w1, b1, w2, b2):
    # pure-JAX f32 reference with identical semantics
    mu = jnp.mean(x, axis=-1, keepdims=True)
    var = jnp.mean((x - mu) ** 2, axis=-1, keepdims=True)
    xn = (x - mu) / jnp.sqrt(var + 1e-5) * gamma + beta
    h = xn @ w1 + b1
    h = 0.5 * h * (1.0 + jax.lax.erf(h / math.sqrt(2.0)))
    y = h @ w2 + b2
    return xn + y


if __name__ == "__main__":
    key = jax.random.PRNGKey(0)
    B, S, C = 2, 8, 32   # batch=2, seq=8, channels=32

    k_x, k_g, k_b, k_w1, k_b1, k_w2, k_b2 = jax.random.split(key, 7)
    x = jax.random.normal(k_x, (B, S, C), dtype=jnp.float32)

    # LayerNorm affine (perturbed from default init to exercise the path)
    gamma = 1.0 + 0.1 * jax.random.normal(k_g, (C,), jnp.float32)
    beta = 0.1 * jax.random.normal(k_b, (C,), jnp.float32)

    # Linear params, stored as (in, out) = transpose of PyTorch's (out, in)
    bound = 1.0 / math.sqrt(C)
    w1 = jax.random.uniform(k_w1, (C, C), jnp.float32, -bound, bound)
    b1 = jax.random.uniform(k_b1, (C,), jnp.float32, -bound, bound)
    w2 = jax.random.uniform(k_w2, (C, C), jnp.float32, -bound, bound)
    b2 = jax.random.uniform(k_b2, (C,), jnp.float32, -bound, bound)

    out = simple_res_block(x, gamma, beta, w1, b1, w2, b2)
    out = jax.block_until_ready(out)

    ref = _reference(x, gamma, beta, w1, b1, w2, b2)
    assert out.shape == (B, S, C)
    # matmuls use bf16 operands (f32 accumulation) -> loosened tolerance vs f32 ref
    err = float(jnp.max(jnp.abs(out - ref)))
    assert err < 5e-2, f"mismatch vs reference, max abs err = {err}"

    print("KERNEL_OK")
</pallas_src>

<mosaic_0001>
module attributes {stable_mosaic.version = 11 : i64} {
  func.func @kernel(%arg0: i32, %arg1: i32, %arg2: memref<16x128xf32, #tpu.memory_space<vmem>>, %arg3: memref<1x128xf32, #tpu.memory_space<vmem>>, %arg4: memref<1x128xf32, #tpu.memory_space<vmem>>, %arg5: memref<128x128xbf16, #tpu.memory_space<vmem>>, %arg6: memref<1x128xf32, #tpu.memory_space<vmem>>, %arg7: memref<128x128xbf16, #tpu.memory_space<vmem>>, %arg8: memref<1x128xf32, #tpu.memory_space<vmem>>, %arg9: memref<16x128xf32, #tpu.memory_space<vmem>>, %arg10: memref<16x128xf32, #tpu.memory_space<vmem>>, %arg11: memref<16x128xbf16, #tpu.memory_space<vmem>>) attributes {dimension_semantics = [#tpu.dimension_semantics<parallel>, #tpu.dimension_semantics<arbitrary>], iteration_bounds = array<i64: 1, 1>, scalar_prefetch = 0 : i64, scratch_operands = 2 : i64, tpu.core_type = #tpu.core_type<tc>, window_params = [{transform_indices = @transform_0, window_bounds = array<i64: 16, 128>}, {pipeline_mode = #tpu.pipeline_mode<synchronous>, transform_indices = @transform_1, window_bounds = array<i64: 1, 128>}, {pipeline_mode = #tpu.pipeline_mode<synchronous>, transform_indices = @transform_2, window_bounds = array<i64: 1, 128>}, {transform_indices = @transform_3, window_bounds = array<i64: 128, 128>}, {transform_indices = @transform_4, window_bounds = array<i64: 1, 128>}, {transform_indices = @transform_5, window_bounds = array<i64: 128, 128>}, {pipeline_mode = #tpu.pipeline_mode<synchronous>, transform_indices = @transform_6, window_bounds = array<i64: 1, 128>}, {transform_indices = @transform_7, window_bounds = array<i64: 16, 128>}]} {
    %c0_i32 = arith.constant 0 : i32
    %0 = arith.cmpi eq, %arg1, %c0_i32 : i32
    %1 = arith.extui %0 : i1 to i32
    %c0_i32_0 = arith.constant 0 : i32
    %2 = arith.cmpi ne, %1, %c0_i32_0 : i32
    scf.if %2 {
      %c0_18 = arith.constant 0 : index
      %c0_19 = arith.constant 0 : index
      %26 = vector.load %arg2[%c0_18, %c0_19] : memref<16x128xf32, #tpu.memory_space<vmem>>, vector<16x128xf32>
      %cst_20 = arith.constant dense<0.000000e+00> : vector<16xf32>
      %27 = vector.multi_reduction <add>, %26, %cst_20 [1] : vector<16x128xf32> to vector<16xf32>
      %28 = vector.shape_cast %27 : vector<16xf32> to vector<16x1xf32>
      %cst_21 = arith.constant 3.125000e-02 : f32
      %29 = vector.broadcast %cst_21 : f32 to vector<16x1xf32>
      %30 = arith.mulf %28, %29 : vector<16x1xf32>
      %31 = vector.broadcast %30 : vector<16x1xf32> to vector<16x128xf32>
      %32 = arith.subf %26, %31 : vector<16x128xf32>
      %33 = tpu.iota {dimensions = array<i32: 1>} : vector<16x128xi32>
      %c32_i32 = arith.constant 32 : i32
      %34 = vector.broadcast %c32_i32 : i32 to vector<16x128xi32>
      %35 = arith.cmpi slt, %33, %34 : vector<16x128xi32>
      %cst_22 = arith.constant 0.000000e+00 : f32
      %36 = vector.broadcast %cst_22 : f32 to vector<16x128xf32>
      %37 = arith.select %35, %32, %36 : vector<16x128xi1>, vector<16x128xf32>
      %38 = arith.mulf %37, %37 : vector<16x128xf32>
      %cst_23 = arith.constant dense<0.000000e+00> : vector<16xf32>
      %39 = vector.multi_reduction <add>, %38, %cst_23 [1] : vector<16x128xf32> to vector<16xf32>
      %40 = vector.shape_cast %39 : vector<16xf32> to vector<16x1xf32>
      %cst_24 = arith.constant 3.125000e-02 : f32
      %41 = vector.broadcast %cst_24 : f32 to vector<16x1xf32>
      %42 = arith.mulf %40, %41 : vector<16x1xf32>
      %cst_25 = arith.constant 9.99999974E-6 : f32
      %43 = vector.broadcast %cst_25 : f32 to vector<16x1xf32>
      %44 = arith.addf %42, %43 : vector<16x1xf32>
      %45 = math.rsqrt %44 : vector<16x1xf32>
      %46 = vector.broadcast %45 : vector<16x1xf32> to vector<16x128xf32>
      %47 = arith.mulf %37, %46 : vector<16x128xf32>
      %c0_26 = arith.constant 0 : index
      %c0_27 = arith.constant 0 : index
      %48 = vector.load %arg3[%c0_26, %c0_27] : memref<1x128xf32, #tpu.memory_space<vmem>>, vector<1x128xf32>
      %49 = vector.broadcast %48 : vector<1x128xf32> to vector<16x128xf32>
      %50 = arith.mulf %47, %49 : vector<16x128xf32>
      %c0_28 = arith.constant 0 : index
      %c0_29 = arith.constant 0 : index
      %51 = vector.load %arg4[%c0_28, %c0_29] : memref<1x128xf32, #tpu.memory_space<vmem>>, vector<1x128xf32>
      %52 = vector.broadcast %51 : vector<1x128xf32> to vector<16x128xf32>
      %53 = arith.addf %50, %52 : vector<16x128xf32>
      %c0_30 = arith.constant 0 : index
      %c0_31 = arith.constant 0 : index
      %54 = vector.load %arg10[%c0_30, %c0_31] : memref<16x128xf32, #tpu.memory_space<vmem>>, vector<16x128xf32>
      tpu.vector_store %arg10[%c0_30, %c0_31], %53 {strides = array<i32>} : memref<16x128xf32, #tpu.memory_space<vmem>>, vector<16x128xf32>,
      %55 = arith.truncf %53 : vector<16x128xf32> to vector<16x128xbf16>
      %c0_32 = arith.constant 0 : index
      %c0_33 = arith.constant 0 : index
      %56 = vector.load %arg11[%c0_32, %c0_33] : memref<16x128xbf16, #tpu.memory_space<vmem>>, vector<16x128xbf16>
      tpu.vector_store %arg11[%c0_32, %c0_33], %55 {strides = array<i32>} : memref<16x128xbf16, #tpu.memory_space<vmem>>, vector<16x128xbf16>,
    } else {
    }
    %c0 = arith.constant 0 : index
    %c0_1 = arith.constant 0 : index
    %3 = vector.load %arg11[%c0, %c0_1] : memref<16x128xbf16, #tpu.memory_space<vmem>>, vector<16x128xbf16>
    %c0_2 = arith.constant 0 : index
    %c0_3 = arith.constant 0 : index
    %4 = vector.load %arg5[%c0_2, %c0_3] : memref<128x128xbf16, #tpu.memory_space<vmem>>, vector<128x128xbf16>
    %cst = arith.constant dense<0.000000e+00> : vector<16x128xf32>
    %5 = tpu.matmul %3, %4, %cst {dimension_numbers = #tpu.dot_dimension_numbers<[1], [0], [0], [1], [0, 0, 1, 1], [], []>} : vector<16x128xbf16>, vector<128x128xbf16>, vector<16x128xf32> -> vector<16x128xf32>
    %c0_4 = arith.constant 0 : index
    %c0_5 = arith.constant 0 : index
    %6 = vector.load %arg6[%c0_4, %c0_5] : memref<1x128xf32, #tpu.memory_space<vmem>>, vector<1x128xf32>
    %7 = vector.broadcast %6 : vector<1x128xf32> to vector<16x128xf32>
    %8 = arith.addf %5, %7 : vector<16x128xf32>
    %cst_6 = arith.constant 5.000000e-01 : f32
    %9 = vector.broadcast %cst_6 : f32 to vector<16x128xf32>
    %10 = arith.mulf %9, %8 : vector<16x128xf32>
    %cst_7 = arith.constant 0.707106769 : f32
    %11 = vector.broadcast %cst_7 : f32 to vector<16x128xf32>
    %12 = arith.mulf %8, %11 : vector<16x128xf32>
    %13 = math.erf %12 : vector<16x128xf32>
    %cst_8 = arith.constant 1.000000e+00 : f32
    %14 = vector.broadcast %cst_8 : f32 to vector<16x128xf32>
    %15 = arith.addf %14, %13 : vector<16x128xf32>
    %16 = arith.mulf %10, %15 : vector<16x128xf32>
    %c0_9 = arith.constant 0 : index
    %c0_10 = arith.constant 0 : index
    %17 = vector.load %arg10[%c0_9, %c0_10] : memref<16x128xf32, #tpu.memory_space<vmem>>, vector<16x128xf32>
    %18 = arith.truncf %16 : vector<16x128xf32> to vector<16x128xbf16>
    %c0_11 = arith.constant 0 : index
    %c0_12 = arith.constant 0 : index
    %19 = vector.load %arg7[%c0_11, %c0_12] : memref<128x128xbf16, #tpu.memory_space<vmem>>, vector<128x128xbf16>
    %cst_13 = arith.constant dense<0.000000e+00> : vector<16x128xf32>
    %20 = tpu.matmul %18, %19, %cst_13 {dimension_numbers = #tpu.dot_dimension_numbers<[1], [0], [0], [1], [0, 0, 1, 1], [], []>} : vector<16x128xbf16>, vector<128x128xbf16>, vector<16x128xf32> -> vector<16x128xf32>
    %21 = arith.addf %17, %20 : vector<16x128xf32>
    %c0_14 = arith.constant 0 : index
    %c0_15 = arith.constant 0 : index
    %22 = vector.load %arg10[%c0_14, %c0_15] : memref<16x128xf32, #tpu.memory_space<vmem>>, vector<16x128xf32>
    tpu.vector_store %arg10[%c0_14, %c0_15], %21 {strides = array<i32>} : memref<16x128xf32, #tpu.memory_space<vmem>>, vector<16x128xf32>,
    %c0_i32_16 = arith.constant 0 : i32
    %23 = arith.cmpi eq, %arg1, %c0_i32_16 : i32
    %24 = arith.extui %23 : i1 to i32
    %c0_i32_17 = arith.constant 0 : i32
    %25 = arith.cmpi ne, %24, %c0_i32_17 : i32
    scf.if %25 {
      %c0_18 = arith.constant 0 : index
      %c0_19 = arith.constant 0 : index
      %26 = vector.load %arg10[%c0_18, %c0_19] : memref<16x128xf32, #tpu.memory_space<vmem>>, vector<16x128xf32>
      %c0_20 = arith.constant 0 : index
      %c0_21 = arith.constant 0 : index
      %27 = vector.load %arg8[%c0_20, %c0_21] : memref<1x128xf32, #tpu.memory_space<vmem>>, vector<1x128xf32>
      %28 = vector.broadcast %27 : vector<1x128xf32> to vector<16x128xf32>
      %29 = arith.addf %26, %28 : vector<16x128xf32>
      %c0_22 = arith.constant 0 : index
      %c0_23 = arith.constant 0 : index
      %30 = vector.load %arg9[%c0_22, %c0_23] : memref<16x128xf32, #tpu.memory_space<vmem>>, vector<16x128xf32>
      tpu.vector_store %arg9[%c0_22, %c0_23], %29 {strides = array<i32>} : memref<16x128xf32, #tpu.memory_space<vmem>>, vector<16x128xf32>,
    } else {
    }
    return
  }
  func.func @transform_0(%arg0: i32, %arg1: i32) -> (i32, i32) {
    %c0_i32 = arith.constant 0 : i32
    %c0_i32_0 = arith.constant 0 : i32
    return %arg0, %c0_i32 : i32, i32
  }
  func.func @transform_1(%arg0: i32, %arg1: i32) -> (i32, i32) {
    %c0_i32 = arith.constant 0 : i32
    %c0_i32_0 = arith.constant 0 : i32
    %c0_i32_1 = arith.constant 0 : i32
    return %c0_i32, %c0_i32_0 : i32, i32
  }
  func.func @transform_2(%arg0: i32, %arg1: i32) -> (i32, i32) {
    %c0_i32 = arith.constant 0 : i32
    %c0_i32_0 = arith.constant 0 : i32
    %c0_i32_1 = arith.constant 0 : i32
    return %c0_i32, %c0_i32_0 : i32, i32
  }
  func.func @transform_3(%arg0: i32, %arg1: i32) -> (i32, i32) {
    %c0_i32 = arith.constant 0 : i32
    %c0_i32_0 = arith.constant 0 : i32
    return %c0_i32, %arg1 : i32, i32
  }
  func.func @transform_4(%arg0: i32, %arg1: i32) -> (i32, i32) {
    %c0_i32 = arith.constant 0 : i32
    %c0_i32_0 = arith.constant 0 : i32
    return %c0_i32, %arg1 : i32, i32
  }
  func.func @transform_5(%arg0: i32, %arg1: i32) -> (i32, i32) {
    %c0_i32 = arith.constant 0 : i32
    %c0_i32_0 = arith.constant 0 : i32
    return %arg1, %c0_i32 : i32, i32
  }
  func.func @transform_6(%arg0: i32, %arg1: i32) -> (i32, i32) {
    %c0_i32 = arith.constant 0 : i32
    %c0_i32_0 = arith.constant 0 : i32
    %c0_i32_1 = arith.constant 0 : i32
    return %c0_i32, %c0_i32_0 : i32, i32
  }
  func.func @transform_7(%arg0: i32, %arg1: i32) -> (i32, i32) {
    %c0_i32 = arith.constant 0 : i32
    %c0_i32_0 = arith.constant 0 : i32
    return %arg0, %c0_i32 : i32, i32
  }
}

</mosaic_0001>

<llo_original>
// kernel: tpu_custom_call.1
$region0: #{tpu_custom_call.1}
  #allocation0 [shape = 'u32[]', space=smem, size = 0x4, offset = 0x4, fixed_abs, tag = 'smem constant byte address 0x4 - core index']
  #allocation1 [shape = 'u32[144,128]{1,0:T(1,128)}', space=vmem, size = 0x12000, scoped, tag = 'internal scratch']
  #allocation2 [shape = 'f32[16,128]{1,0:T(8,128)}', space=vmem, size = 0x2000, scoped, tag = 'scratch operand']
  #allocation3 [shape = 'bf16[16,128]{1,0:T(16,128)(2,1)}', space=vmem, size = 0x1000, scoped, tag = 'scratch operand']
  %s0 = inlined_call_operand.hbm [shape: f32[16,128], index: 0, kind: input, shape index: {}]
  %s1 = inlined_call_operand.vmem [shape: f32[1,128], index: 1, kind: input, shape index: {}]
  %s2 = inlined_call_operand.vmem [shape: f32[1,128], index: 2, kind: input, shape index: {}]
  %s3 = inlined_call_operand.hbm [shape: bf16[128,128], index: 3, kind: input, shape index: {}]
  %s4 = inlined_call_operand.vmem [shape: f32[1,128], index: 4, kind: input, shape index: {}]
  %s5 = inlined_call_operand.hbm [shape: bf16[128,128], index: 5, kind: input, shape index: {}]
  %s6 = inlined_call_operand.vmem [shape: f32[1,128], index: 6, kind: input, shape index: {}]
  %s7 = inlined_call_operand.hbm [shape: f32[16,128], index: 7, kind: output, shape index: {}]
  %s8 = sld [smem:[#allocation0]]
  $region58: #{tpu_custom_call.1} parent=0
    _
  %s10 = ssub.s32 1, %s8
  %s11 = scalar_select 0, %s10, %s8
  $region1: #{tpu_custom_call.1} parent=0
    #allocation4 [shape = 'u8[8192]{0}', space=vmem, size = 0x2000, scoped, tag = 'input window, operand 0, single buffered']
    #allocation5 [shape = 's32[1]{0}', space=sflag, size = 0x4, scoped, tag = 'scoped memory for tpu_custom_call.1']
    #allocation6 [shape = 's32[1]{0}', space=sflag, size = 0x4, scoped, tag = 'scoped memory for tpu_custom_call.1']
    #allocation7 [shape = 'u8[32768]{0}', space=vmem, size = 0x8000, scoped, tag = 'input window, operand 3, single buffered']
    #allocation8 [shape = 's32[1]{0}', space=sflag, size = 0x4, scoped, tag = 'scoped memory for tpu_custom_call.1']
    #allocation9 [shape = 'u8[32768]{0}', space=vmem, size = 0x8000, scoped, tag = 'input window, operand 5, single buffered']
    #allocation10 [shape = 'u8[8192]{0}', space=vmem, size = 0x2000, scoped, tag = 'output window, operand 0, single buffered']
    %12 = vsyncpa [#allocation5], 0
    %13 = vsyncpa [#allocation8], 0
    %14 = vsyncpa [#allocation6], 0
    // Predicated region
    $region2: #{tpu_custom_call.1} parent=1 // pred_check
      _
    $region3: #{tpu_custom_call.1} parent=1 // pred_check_branch
      %16 = sbr.rel (0) target = $region5
    $region4: #{tpu_custom_call.1} parent=1 // pred_region
      %s18 = ssub.s32 256, 256
      %19 = vsyncadd [#allocation5], %s18
      %s20 = sshll.u32 [#allocation4], 4
      %s21 = int_to_ptr.vmem [resolvable:$true] %s20
      %26 = dma.hbm_to_vmem [thread:$0]  %s0, 256, %s21, [#allocation5], 128, 128, 8
    $region5: #{tpu_custom_call.1} parent=1 // pred_fallthru
      _
    // Predicated region
    $region6: #{tpu_custom_call.1} parent=1 // pred_check
      _
    $region7: #{tpu_custom_call.1} parent=1 // pred_check_branch
      %28 = sbr.rel (0) target = $region9
    $region8: #{tpu_custom_call.1} parent=1 // pred_region
      _
    $region9: #{tpu_custom_call.1} parent=1 // pred_fallthru
      _
    // Predicated region
    $region10: #{tpu_custom_call.1} parent=1 // pred_check
      _
    $region11: #{tpu_custom_call.1} parent=1 // pred_check_branch
      %30 = sbr.rel (0) target = $region13
    $region12: #{tpu_custom_call.1} parent=1 // pred_region
      _
    $region13: #{tpu_custom_call.1} parent=1 // pred_fallthru
      _
    // Predicated region
    $region14: #{tpu_custom_call.1} parent=1 // pred_check
      _
    $region15: #{tpu_custom_call.1} parent=1 // pred_check_branch
      %32 = sbr.rel (0) target = $region17
    $region16: #{tpu_custom_call.1} parent=1 // pred_region
      %s34 = ssub.s32 1024, 1024
      %35 = vsyncadd [#allocation8], %s34
      %s36 = sshll.u32 [#allocation7], 4
      %s37 = int_to_ptr.vmem [resolvable:$true] %s36
      %42 = dma.hbm_to_vmem [thread:$0]  %s3, 1024, %s37, [#allocation8], 64, 64, 4
    $region17: #{tpu_custom_call.1} parent=1 // pred_fallthru
      _
    // Predicated region
    $region18: #{tpu_custom_call.1} parent=1 // pred_check
      _
    $region19: #{tpu_custom_call.1} parent=1 // pred_check_branch
      %44 = sbr.rel (0) target = $region21
    $region20: #{tpu_custom_call.1} parent=1 // pred_region
      _
    $region21: #{tpu_custom_call.1} parent=1 // pred_fallthru
      _
    // Predicated region
    $region22: #{tpu_custom_call.1} parent=1 // pred_check
      _
    $region23: #{tpu_custom_call.1} parent=1 // pred_check_branch
      %46 = sbr.rel (0) target = $region25
    $region24: #{tpu_custom_call.1} parent=1 // pred_region
      %s48 = ssub.s32 1024, 1024
      %49 = vsyncadd [#allocation8], %s48
      %s50 = sshll.u32 [#allocation9], 4
      %s51 = int_to_ptr.vmem [resolvable:$true] %s50
      %56 = dma.hbm_to_vmem [thread:$0]  %s5, 1024, %s51, [#allocation8], 64, 64, 4
    $region25: #{tpu_custom_call.1} parent=1 // pred_fallthru
      _
    // Predicated region
    $region26: #{tpu_custom_call.1} parent=1 // pred_check
      _
    $region27: #{tpu_custom_call.1} parent=1 // pred_check_branch
      %58 = sbr.rel (0) target = $region29
    $region28: #{tpu_custom_call.1} parent=1 // pred_region
      _
    $region29: #{tpu_custom_call.1} parent=1 // pred_fallthru
      _
    // Predicated region
    $region30: #{tpu_custom_call.1} parent=1 // pred_check
      _
    $region31: #{tpu_custom_call.1} parent=1 // pred_check_branch
      %60 = sbr.rel (0) target = $region33
    $region32: #{tpu_custom_call.1} parent=1 // pred_region
      %61 = dma.done [#allocation5], 256
    $region33: #{tpu_custom_call.1} parent=1 // pred_fallthru
      _
    // Predicated region
    $region34: #{tpu_custom_call.1} parent=1 // pred_check
      _
    $region35: #{tpu_custom_call.1} parent=1 // pred_check_branch
      %63 = sbr.rel (0) target = $region37
    $region36: #{tpu_custom_call.1} parent=1 // pred_region
      %64 = dma.done [#allocation8], 1024
    $region37: #{tpu_custom_call.1} parent=1 // pred_fallthru
      _
    // Predicated region
    $region38: #{tpu_custom_call.1} parent=1 // pred_check
      _
    $region39: #{tpu_custom_call.1} parent=1 // pred_check_branch
      %66 = sbr.rel (0) target = $region41
    $region40: #{tpu_custom_call.1} parent=1 // pred_region
      %67 = dma.done [#allocation8], 1024
    $region41: #{tpu_custom_call.1} parent=1 // pred_fallthru
      _
    %p69 = scmp.eq.s32.totalorder 0, 0
    // Predicated region
    $region42: #{tpu_custom_call.1} parent=1 // pred_check
      %p70 = pneg %p69
    $region43: #{tpu_custom_call.1} parent=1 // pred_check_branch
      %72 = sbr.rel (%p70) target = $region45
    $region44: #{tpu_custom_call.1} parent=1 // pred_region
      %v73 = vld [vmem:[#allocation4] sm:$0xff]
      %v74 = vld [vmem:[#allocation4 + $0x8] sm:$0xff]
      %75 = vadd.xlane.f32.xlu0 %v73
      %v76 = vpop.xlane.xlu0 %75
      %77 = vadd.xlane.f32.xlu0 %v74
      %v78 = vpop.xlane.xlu0 %77
      %v79 = vmul.f32 %v76, 0.03125
      %v80 = vmul.f32 %v78, 0.03125
      %v81 = vsub.f32 %v73, %v79
      %v82 = vsub.f32 %v74, %v80
      %v83 = vlaneseq
      %v84 = vand.u32 %v83, 127
      %vm85 = vcmp.lt.s32.totalorder %v84, 32
      %v86 = vsel %vm85, %v81, 0.0
      %v87 = vsel %vm85, %v82, 0.0
      %v88 = vmul.f32 %v86, %v86
      %v89 = vmul.f32 %v87, %v87
      %90 = vadd.xlane.f32.xlu0 %v88
      %v91 = vpop.xlane.xlu0 %90
      %92 = vadd.xlane.f32.xlu0 %v89
      %v93 = vpop.xlane.xlu0 %92
      %v94 = vmul.f32 %v91, 0.03125
      %v95 = vmul.f32 %v93, 0.03125
      %v96 = vadd.f32 %v94, 1e-05
      %v97 = vadd.f32 %v95, 1e-05
      %v98 = vrsqrt.pop %v96
      %v99 = vrsqrt.pop %v97
      %v100 = vmul.f32 %v86, %v98
      %v101 = vmul.f32 %v87, %v99
      %v102 = vld [vmem:[%s1] sm:$0x1]
      %v104 = vlaneseq
      %v105 = vshrl.u32 %v104, 7
      %v106 = vsub.s32 0, %v105
      %v107 = vrot.slane %v102, %v106
      %v109 = vmul.f32 %v100, %v107
      %v110 = vmul.f32 %v101, %v107
      %v111 = vld [vmem:[%s2] sm:$0x1]
      %v113 = vlaneseq
      %v114 = vshrl.u32 %v113, 7
      %v115 = vsub.s32 0, %v114
      %v116 = vrot.slane %v111, %v115
      %v118 = vadd.f32 %v109, %v116
      %v119 = vadd.f32 %v110, %v116
      %120 = vst [vmem:[#allocation2] sm:$0xff] %v118
      %121 = vst [vmem:[#allocation2 + $0x8] sm:$0xff] %v119
      %v122 = vpack.c.bf16 %v119, %v118
      %123 = vst [vmem:[#allocation3] sm:$0xff] %v122
    $region45: #{tpu_custom_call.1} parent=1 // pred_fallthru
      _
    %v124 = vld [vmem:[#allocation3] sm:$0xff]
    %v125 = vld [vmem:[#allocation7] sm:$0xf]
    %v126 = vld [vmem:[#allocation7 + $0x4] sm:$0xf]
    %v127 = vld [vmem:[#allocation7 + $0x8] sm:$0xf]
    %v128 = vld [vmem:[#allocation7 + $0xc] sm:$0xf]
    %v129 = vld [vmem:[#allocation7 + $0x10] sm:$0xf]
    %v130 = vld [vmem:[#allocation7 + $0x14] sm:$0xf]
    %v131 = vld [vmem:[#allocation7 + $0x18] sm:$0xf]
    %v132 = vld [vmem:[#allocation7 + $0x1c] sm:$0xf]
    %v133 = vld [vmem:[#allocation7 + $0x20] sm:$0xf]
    %v134 = vld [vmem:[#allocation7 + $0x24] sm:$0xf]
    %v135 = vld [vmem:[#allocation7 + $0x28] sm:$0xf]
    %v136 = vld [vmem:[#allocation7 + $0x2c] sm:$0xf]
    %v137 = vld [vmem:[#allocation7 + $0x30] sm:$0xf]
    %v138 = vld [vmem:[#allocation7 + $0x34] sm:$0xf]
    %v139 = vld [vmem:[#allocation7 + $0x38] sm:$0xf]
    %v140 = vld [vmem:[#allocation7 + $0x3c] sm:$0xf]
    %v141 = vld [vmem:[%s4] sm:$0x1]
    %v143 = vlaneseq
    %v144 = vshrl.u32 %v143, 7
    %v145 = vsub.s32 0, %v144
    %v146 = vrot.slane %v141, %v145
    %v164 = vunpack.c.l.b16 %v125
    %v165 = vunpack.c.l.b16 %v126
    %v166 = vunpack.c.l.b16 %v127
    %v167 = vunpack.c.l.b16 %v128
    %v168 = vunpack.c.l.b16 %v129
    %v169 = vunpack.c.l.b16 %v130
    %v170 = vunpack.c.l.b16 %v131
    %v171 = vunpack.c.l.b16 %v132
    %v172 = vunpack.c.l.b16 %v133
    %v173 = vunpack.c.l.b16 %v134
    %v174 = vunpack.c.l.b16 %v135
    %v175 = vunpack.c.l.b16 %v136
    %v176 = vunpack.c.l.b16 %v137
    %v177 = vunpack.c.l.b16 %v138
    %v178 = vunpack.c.l.b16 %v139
    %v179 = vunpack.c.l.b16 %v140
    %v180 = vpack.c.b16 %v165, %v164
    %v181 = vpack.c.b16 %v167, %v166
    %v182 = vpack.c.b16 %v169, %v168
    %v183 = vpack.c.b16 %v171, %v170
    %v184 = vpack.c.b16 %v173, %v172
    %v185 = vpack.c.b16 %v175, %v174
    %v186 = vpack.c.b16 %v177, %v176
    %v187 = vpack.c.b16 %v179, %v178
    %196 = vmatprep.subr.bf16.mxu0 0
    %197 = vmatpush1.bf16.msra.mxu0 %v180
    %198 = vmatprep.subr.bf16.mxu0 0
    %199 = vmatpush1.bf16.msra.mxu0 %v181
    %200 = vmatprep.subr.bf16.mxu0 0
    %201 = vmatpush1.bf16.msra.mxu0 %v182
    %202 = vmatprep.subr.bf16.mxu0 0
    %203 = vmatpush1.bf16.msra.mxu0 %v183
    %204 = vmatprep.subr.bf16.mxu0 0
    %205 = vmatpush1.bf16.msra.mxu0 %v184
    %206 = vmatprep.subr.bf16.mxu0 0
    %207 = vmatpush1.bf16.msra.mxu0 %v185
    %208 = vmatprep.subr.bf16.mxu0 0
    %209 = vmatpush1.bf16.msra.mxu0 %v186
    %210 = vmatprep.subr.bf16.mxu0 0
    %211 = vmatpush1.bf16.msra.mxu0 %v187
    %212 = vmatprep.subr.bf16.mxu0 0
    %213 = vmatpush1.bf16.msra.mxu0 0
    %214 = vmatprep.subr.bf16.mxu0 0
    %215 = vmatpush1.bf16.msra.mxu0 0
    %216 = vmatprep.subr.bf16.mxu0 0
    %217 = vmatpush1.bf16.msra.mxu0 0
    %218 = vmatprep.subr.bf16.mxu0 0
    %219 = vmatpush1.bf16.msra.mxu0 0
    %220 = vmatprep.subr.bf16.mxu0 0
    %221 = vmatpush1.bf16.msra.mxu0 0
    %222 = vmatprep.subr.bf16.mxu0 0
    %223 = vmatpush1.bf16.msra.mxu0 0
    %224 = vmatprep.subr.bf16.mxu0 0
    %225 = vmatpush1.bf16.msra.mxu0 0
    %226 = vmatprep.subr.bf16.mxu0 0
    %227 = vmatpush1.bf16.msra.mxu0 0
    %228 = vmatprep.mubr.bf16.mxu0 0
    %229 = vmatmul.mubr.bf16.gmra.mrb[0].mxu0 %v124
    %v230 = vpop.f32.mrb[0].mxu0
    %v231 = vadd.f32 %v146, %v230
    %v232 = vpop.f32.mrb[0].mxu0
    %v233 = vpop.f32.mrb[0].mxu0
    %v234 = vadd.f32 %v146, %v233
    %v235 = vpop.f32.mrb[0].mxu0
    %236 = vdwg.mxu0
    %v237 = vmul.f32 %v231, 0.5
    %v238 = vmul.f32 %v234, 0.5
    %v239 = vmul.f32 %v231, 0.70710677
    %v240 = vmul.f32 %v234, 0.70710677
    %v241 = verf.f32.pop %v239
    %v242 = verf.f32.pop %v240
    %v243 = vadd.f32 %v241, 1.0
    %v244 = vadd.f32 %v242, 1.0
    %v245 = vmul.f32 %v237, %v243
    %v246 = vmul.f32 %v238, %v244
    %v247 = vld [vmem:[#allocation2] sm:$0xff]
    %v248 = vld [vmem:[#allocation2 + $0x8] sm:$0xff]
    %v249 = vpack.c.bf16 %v246, %v245
    %v250 = vld [vmem:[#allocation9] sm:$0xf]
    %v251 = vld [vmem:[#allocation9 + $0x4] sm:$0xf]
    %v252 = vld [vmem:[#allocation9 + $0x8] sm:$0xf]
    %v253 = vld [vmem:[#allocation9 + $0xc] sm:$0xf]
    %v254 = vld [vmem:[#allocation9 + $0x10] sm:$0xf]
    %v255 = vld [vmem:[#allocation9 + $0x14] sm:$0xf]
    %v256 = vld [vmem:[#allocation9 + $0x18] sm:$0xf]
    %v257 = vld [vmem:[#allocation9 + $0x1c] sm:$0xf]
    %v258 = vld [vmem:[#allocation9 + $0x20] sm:$0xf]
    %v259 = vld [vmem:[#allocation9 + $0x24] sm:$0xf]
    %v260 = vld [vmem:[#allocation9 + $0x28] sm:$0xf]
    %v261 = vld [vmem:[#allocation9 + $0x2c] sm:$0xf]
    %v262 = vld [vmem:[#allocation9 + $0x30] sm:$0xf]
    %v263 = vld [vmem:[#allocation9 + $0x34] sm:$0xf]
    %v264 = vld [vmem:[#allocation9 + $0x38] sm:$0xf]
    %v265 = vld [vmem:[#allocation9 + $0x3c] sm:$0xf]
    %v282 = vunpack.c.l.b16 %v250
    %v283 = vunpack.c.l.b16 %v251
    %v284 = vunpack.c.l.b16 %v252
    %v285 = vunpack.c.l.b16 %v253
    %v286 = vunpack.c.l.b16 %v254
    %v287 = vunpack.c.l.b16 %v255
    %v288 = vunpack.c.l.b16 %v256
    %v289 = vunpack.c.l.b16 %v257
    %v290 = vunpack.c.l.b16 %v258
    %v291 = vunpack.c.l.b16 %v259
    %v292 = vunpack.c.l.b16 %v260
    %v293 = vunpack.c.l.b16 %v261
    %v294 = vunpack.c.l.b16 %v262
    %v295 = vunpack.c.l.b16 %v263
    %v296 = vunpack.c.l.b16 %v264
    %v297 = vunpack.c.l.b16 %v265
    %v298 = vpack.c.b16 %v283, %v282
    %v299 = vpack.c.b16 %v285, %v284
    %v300 = vpack.c.b16 %v287, %v286
    %v301 = vpack.c.b16 %v289, %v288
    %v302 = vpack.c.b16 %v291, %v290
    %v303 = vpack.c.b16 %v293, %v292
    %v304 = vpack.c.b16 %v295, %v294
    %v305 = vpack.c.b16 %v297, %v296
    %314 = vmatprep.subr.bf16.mxu0 0
    %315 = vmatpush1.bf16.msra.mxu0 %v298
    %316 = vmatprep.subr.bf16.mxu0 0
    %317 = vmatpush1.bf16.msra.mxu0 %v299
    %318 = vmatprep.subr.bf16.mxu0 0
    %319 = vmatpush1.bf16.msra.mxu0 %v300
    %320 = vmatprep.subr.bf16.mxu0 0
    %321 = vmatpush1.bf16.msra.mxu0 %v301
    %322 = vmatprep.subr.bf16.mxu0 0
    %323 = vmatpush1.bf16.msra.mxu0 %v302
    %324 = vmatprep.subr.bf16.mxu0 0
    %325 = vmatpush1.bf16.msra.mxu0 %v303
    %326 = vmatprep.subr.bf16.mxu0 0
    %327 = vmatpush1.bf16.msra.mxu0 %v304
    %328 = vmatprep.subr.bf16.mxu0 0
    %329 = vmatpush1.bf16.msra.mxu0 %v305
    %330 = vmatprep.subr.bf16.mxu0 0
    %331 = vmatpush1.bf16.msra.mxu0 0
    %332 = vmatprep.subr.bf16.mxu0 0
    %333 = vmatpush1.bf16.msra.mxu0 0
    %334 = vmatprep.subr.bf16.mxu0 0
    %335 = vmatpush1.bf16.msra.mxu0 0
    %336 = vmatprep.subr.bf16.mxu0 0
    %337 = vmatpush1.bf16.msra.mxu0 0
    %338 = vmatprep.subr.bf16.mxu0 0
    %339 = vmatpush1.bf16.msra.mxu0 0
    %340 = vmatprep.subr.bf16.mxu0 0
    %341 = vmatpush1.bf16.msra.mxu0 0
    %342 = vmatprep.subr.bf16.mxu0 0
    %343 = vmatpush1.bf16.msra.mxu0 0
    %344 = vmatprep.subr.bf16.mxu0 0
    %345 = vmatpush1.bf16.msra.mxu0 0
    %346 = vmatprep.mubr.bf16.mxu0 0
    %347 = vmatmul.mubr.bf16.gmra.mrb[0].mxu0 %v249
    %v348 = vpop.f32.mrb[0].mxu0
    %v349 = vadd.f32 0.0, %v348
    %v350 = vpop.f32.mrb[0].mxu0
    %v351 = vpop.f32.mrb[0].mxu0
    %v352 = vadd.f32 0.0, %v351
    %v353 = vpop.f32.mrb[0].mxu0
    %354 = vdwg.mxu0
    %v355 = vadd.f32 %v247, %v349
    %v356 = vadd.f32 %v248, %v352
    %357 = vst [vmem:[#allocation2] sm:$0xff] %v355
    %358 = vst [vmem:[#allocation2 + $0x8] sm:$0xff] %v356
    // Predicated region
    $region46: #{tpu_custom_call.1} parent=1 // pred_check
      %p359 = pneg %p69
    $region47: #{tpu_custom_call.1} parent=1 // pred_check_branch
      %361 = sbr.rel (%p359) target = $region49
    $region48: #{tpu_custom_call.1} parent=1 // pred_region
      %v362 = vld [vmem:[#allocation2] sm:$0xff]
      %v363 = vld [vmem:[#allocation2 + $0x8] sm:$0xff]
      %v364 = vld [vmem:[%s6] sm:$0x1]
      %v366 = vlaneseq
      %v367 = vshrl.u32 %v366, 7
      %v368 = vsub.s32 0, %v367
      %v369 = vrot.slane %v364, %v368
      %v371 = vadd.f32 %v362, %v369
      %v372 = vadd.f32 %v363, %v369
      %373 = vst [vmem:[#allocation10] sm:$0xff] %v371
      %374 = vst [vmem:[#allocation10 + $0x8] sm:$0xff] %v372
    $region49: #{tpu_custom_call.1} parent=1 // pred_fallthru
      _
    // Predicated region
    $region50: #{tpu_custom_call.1} parent=1 // pred_check
      _
    $region51: #{tpu_custom_call.1} parent=1 // pred_check_branch
      %376 = sbr.rel (0) target = $region53
    $region52: #{tpu_custom_call.1} parent=1 // pred_region
      %s378 = ssub.s32 256, 256
      %379 = vsyncadd [#allocation6], %s378
      %s380 = sshll.u32 [#allocation10], 4
      %s381 = int_to_ptr.vmem [resolvable:$true] %s380
      %386 = dma.vmem_to_hbm [thread:$0]  %s381, 256, %s7, [#allocation6], 128, 128, 8
    $region53: #{tpu_custom_call.1} parent=1 // pred_fallthru
      _
    // Predicated region
    $region54: #{tpu_custom_call.1} parent=1 // pred_check
      _
    $region55: #{tpu_custom_call.1} parent=1 // pred_check_branch
      %388 = sbr.rel (0) target = $region57
    $region56: #{tpu_custom_call.1} parent=1 // pred_region
      %389 = dma.done [#allocation6], 256
    $region57: #{tpu_custom_call.1} parent=1 // pred_fallthru
      _
    %390 = vsyncpa [#allocation5], 1
    %391 = vsyncpa [#allocation8], 1
    %392 = vsyncpa [#allocation6], 1

</llo_original>
